<compile_context>
chip_gen: v7x
topology: tpu7x:2x2x1
jax: 0.10.0
libtpu: 0.0.40
codegen_flags: <defaults>
</compile_context>

<pallas_src>
import functools

import jax
import jax.numpy as jnp
from jax.experimental import pallas as pl
from jax.experimental.pallas import tpu as pltpu


def _elu_kernel(x_ref, o_ref, *, alpha):
    x = x_ref[...]
    xf = x.astype(jnp.float32) if x.dtype != jnp.float32 else x
    neg = alpha * (jnp.exp(xf) - 1.0)                # EUP exp; VPU mul/sub
    o_ref[...] = jnp.where(xf > 0.0, xf, neg).astype(o_ref.dtype)


def _round_up(a, b):
    return ((a + b - 1) // b) * b


def elu_pallas(x, alpha=1.0, *, max_tile_rows=512, max_cols=1024):
    """ELU via a tiled Pallas kernel.

    Works for any input shape: the array is flattened, padded to a lane-dense
    2-D slab, processed in large blocks, then cropped back to the original shape.
    """
    orig_shape = x.shape
    dtype = x.dtype
    n = x.size
    if n == 0:
        return x

    lane = 128
    # Sub-32-bit dtypes pack along sublanes -> 16-row minimum blocking.
    sublane = 16 if dtype in (jnp.bfloat16, jnp.float16) else 8

    # Lane-dense last dim: multiple of 128, capped at max_cols.
    cols = min(max_cols, _round_up(n, lane))
    rows = pl.cdiv(n, cols)
    tile_rows = min(_round_up(rows, sublane), max_tile_rows)
    rows_padded = _round_up(rows, tile_rows)
    padded_n = rows_padded * cols

    flat = x.reshape(-1)
    if padded_n != n:
        flat = jnp.pad(flat, (0, padded_n - n))      # ELU(0)=0, padding is harmless
    x2d = flat.reshape(rows_padded, cols)

    grid = (rows_padded // tile_rows,)
    out2d = pl.pallas_call(
        functools.partial(_elu_kernel, alpha=alpha),
        out_shape=jax.ShapeDtypeStruct((rows_padded, cols), dtype),
        grid=grid,
        in_specs=[pl.BlockSpec((tile_rows, cols), lambda i: (i, 0))],
        out_specs=pl.BlockSpec((tile_rows, cols), lambda i: (i, 0)),
        compiler_params=pltpu.CompilerParams(
            dimension_semantics=("parallel",),
        ),
    )(x2d)

    if padded_n != n:
        out = out2d.reshape(-1)[:n].reshape(orig_shape)
    else:
        out = out2d.reshape(orig_shape)
    return out


class ELU:
    """JAX/Pallas mirror of the PyTorch ELU module (`size` is metadata only)."""

    def __init__(self, size):
        self.size = size

    def __call__(self, x):
        return elu_pallas(x, alpha=1.0)


if __name__ == "__main__":
    key = jax.random.PRNGKey(0)

    # Small shape consistent with the module: x is [batch, size].
    batch, size = 8, 256
    x = jax.random.normal(key, (batch, size), dtype=jnp.float32) * 3.0

    mod = ELU(size)
    out = jax.block_until_ready(mod(x))
    ref = jax.nn.elu(x)
    assert out.shape == x.shape and out.dtype == x.dtype
    assert jnp.max(jnp.abs(out - ref)) < 1e-5

    # Padding path: shape not a multiple of (8, 128).
    x2 = jax.random.normal(jax.random.PRNGKey(1), (3, 100), dtype=jnp.float32) * 3.0
    out2 = jax.block_until_ready(elu_pallas(x2))
    assert jnp.max(jnp.abs(out2 - jax.nn.elu(x2))) < 1e-5

    # bf16 path (packed sublane layout, compute in f32).
    x3 = (jax.random.normal(jax.random.PRNGKey(2), (16, 384)) * 3.0).astype(jnp.bfloat16)
    out3 = jax.block_until_ready(elu_pallas(x3))
    assert out3.dtype == jnp.bfloat16
    assert jnp.max(jnp.abs(out3.astype(jnp.float32)
                           - jax.nn.elu(x3.astype(jnp.float32)))) < 3e-2

    print("KERNEL_OK")
</pallas_src>

<mosaic_0001>
module attributes {stable_mosaic.version = 11 : i64} {
  func.func @_elu_kernel(%arg0: i32, %arg1: memref<8x1024xf32, #tpu.memory_space<vmem>>, %arg2: memref<8x1024xf32, #tpu.memory_space<vmem>>) attributes {dimension_semantics = [#tpu.dimension_semantics<parallel>], iteration_bounds = array<i64: 1>, scalar_prefetch = 0 : i64, scratch_operands = 0 : i64, tpu.core_type = #tpu.core_type<tc>, window_params = [{transform_indices = @transform_0, window_bounds = array<i64: 8, 1024>}, {transform_indices = @transform_1, window_bounds = array<i64: 8, 1024>}]} {
    %c0 = arith.constant 0 : index
    %c0_0 = arith.constant 0 : index
    %0 = vector.load %arg1[%c0, %c0_0] : memref<8x1024xf32, #tpu.memory_space<vmem>>, vector<8x1024xf32>
    %1 = math.exp %0 : vector<8x1024xf32>
    %cst = arith.constant 1.000000e+00 : f32
    %2 = vector.broadcast %cst : f32 to vector<8x1024xf32>
    %3 = arith.subf %1, %2 : vector<8x1024xf32>
    %cst_1 = arith.constant 1.000000e+00 : f32
    %4 = vector.broadcast %cst_1 : f32 to vector<8x1024xf32>
    %5 = arith.mulf %4, %3 : vector<8x1024xf32>
    %cst_2 = arith.constant 0.000000e+00 : f32
    %6 = vector.broadcast %cst_2 : f32 to vector<8x1024xf32>
    %7 = arith.cmpf ogt, %0, %6 : vector<8x1024xf32>
    %8 = arith.select %7, %0, %5 : vector<8x1024xi1>, vector<8x1024xf32>
    %c0_3 = arith.constant 0 : index
    %c0_4 = arith.constant 0 : index
    %9 = vector.load %arg2[%c0_3, %c0_4] : memref<8x1024xf32, #tpu.memory_space<vmem>>, vector<8x1024xf32>
    tpu.vector_store %arg2[%c0_3, %c0_4], %8 {strides = array<i32>} : memref<8x1024xf32, #tpu.memory_space<vmem>>, vector<8x1024xf32>,
    return
  }
  func.func @transform_0(%arg0: i32) -> (i32, i32) {
    %c0_i32 = arith.constant 0 : i32
    %c0_i32_0 = arith.constant 0 : i32
    return %arg0, %c0_i32 : i32, i32
  }
  func.func @transform_1(%arg0: i32) -> (i32, i32) {
    %c0_i32 = arith.constant 0 : i32
    %c0_i32_0 = arith.constant 0 : i32
    return %arg0, %c0_i32 : i32, i32
  }
}

</mosaic_0001>

<llo_original>
// kernel: tpu_custom_call.1
$region0: #{tpu_custom_call.1}
  #allocation0 [shape = 'u32[]', space=smem, size = 0x4, offset = 0x4, fixed_abs, tag = 'smem constant byte address 0x4 - core index']
  #allocation1 [shape = 'u32[144,128]{1,0:T(1,128)}', space=vmem, size = 0x12000, scoped, tag = 'internal scratch']
  %s0 = inlined_call_operand.hbm [shape: f32[8,1024], index: 0, kind: input, shape index: {}]
  %s1 = inlined_call_operand.hbm [shape: f32[8,1024], index: 1, kind: output, shape index: {}]
  %s2 = sld [smem:[#allocation0]]
  $region18: #{tpu_custom_call.1} parent=0
    _
  %s4 = ssub.s32 1, %s2
  %s5 = scalar_select 0, %s4, %s2
  $region1: #{tpu_custom_call.1} parent=0
    #allocation2 [shape = 'u8[32768]{0}', space=vmem, size = 0x8000, scoped, tag = 'input window, operand 0, single buffered']
    #allocation3 [shape = 's32[1]{0}', space=sflag, size = 0x4, scoped, tag = 'scoped memory for tpu_custom_call.1']
    #allocation4 [shape = 's32[1]{0}', space=sflag, size = 0x4, scoped, tag = 'scoped memory for tpu_custom_call.1']
    #allocation5 [shape = 'u8[32768]{0}', space=vmem, size = 0x8000, scoped, tag = 'output window, operand 0, single buffered']
    %6 = vsyncpa [#allocation3], 0
    %7 = vsyncpa [#allocation4], 0
    // Predicated region
    $region2: #{tpu_custom_call.1} parent=1 // pred_check
      _
    $region3: #{tpu_custom_call.1} parent=1 // pred_check_branch
      %9 = sbr.rel (0) target = $region5
    $region4: #{tpu_custom_call.1} parent=1 // pred_region
      %s11 = ssub.s32 1024, 1024
      %12 = vsyncadd [#allocation3], %s11
      %s14 = sshll.u32 [#allocation2], 4
      %s15 = int_to_ptr.vmem [resolvable:$true] %s14
      %17 = dma.hbm_to_vmem [thread:$0]  %s0, 1024, %s15, [#allocation3]
    $region5: #{tpu_custom_call.1} parent=1 // pred_fallthru
      _
    // Predicated region
    $region6: #{tpu_custom_call.1} parent=1 // pred_check
      _
    $region7: #{tpu_custom_call.1} parent=1 // pred_check_branch
      %19 = sbr.rel (0) target = $region9
    $region8: #{tpu_custom_call.1} parent=1 // pred_region
      %20 = dma.done [#allocation3], 1024
    $region9: #{tpu_custom_call.1} parent=1 // pred_fallthru
      _
    %v21 = vld [vmem:[#allocation2] sm:$0xff]
    %v22 = vld [vmem:[#allocation2 + $0x8] sm:$0xff]
    %v23 = vld [vmem:[#allocation2 + $0x10] sm:$0xff]
    %v24 = vld [vmem:[#allocation2 + $0x18] sm:$0xff]
    %v25 = vld [vmem:[#allocation2 + $0x20] sm:$0xff]
    %v26 = vld [vmem:[#allocation2 + $0x28] sm:$0xff]
    %v27 = vld [vmem:[#allocation2 + $0x30] sm:$0xff]
    %v28 = vld [vmem:[#allocation2 + $0x38] sm:$0xff]
    %v29 = vmul.f32 %v21, 1.442695
    %v30 = vpow.pop %v29
    %v31 = vmul.f32 %v22, 1.442695
    %v32 = vpow.pop %v31
    %v33 = vmul.f32 %v23, 1.442695
    %v34 = vpow.pop %v33
    %v35 = vmul.f32 %v24, 1.442695
    %v36 = vpow.pop %v35
    %v37 = vmul.f32 %v25, 1.442695
    %v38 = vpow.pop %v37
    %v39 = vmul.f32 %v26, 1.442695
    %v40 = vpow.pop %v39
    %v41 = vmul.f32 %v27, 1.442695
    %v42 = vpow.pop %v41
    %v43 = vmul.f32 %v28, 1.442695
    %v44 = vpow.pop %v43
    %v45 = vsub.f32 %v30, 1.0
    %v46 = vsub.f32 %v32, 1.0
    %v47 = vsub.f32 %v34, 1.0
    %v48 = vsub.f32 %v36, 1.0
    %v49 = vsub.f32 %v38, 1.0
    %v50 = vsub.f32 %v40, 1.0
    %v51 = vsub.f32 %v42, 1.0
    %v52 = vsub.f32 %v44, 1.0
    %vm53 = vcmp.gt.f32.partialorder %v21, 0.0
    %vm54 = vcmp.gt.f32.partialorder %v22, 0.0
    %vm55 = vcmp.gt.f32.partialorder %v23, 0.0
    %vm56 = vcmp.gt.f32.partialorder %v24, 0.0
    %vm57 = vcmp.gt.f32.partialorder %v25, 0.0
    %vm58 = vcmp.gt.f32.partialorder %v26, 0.0
    %vm59 = vcmp.gt.f32.partialorder %v27, 0.0
    %vm60 = vcmp.gt.f32.partialorder %v28, 0.0
    %v61 = vsel %vm53, %v21, %v45
    %v62 = vsel %vm54, %v22, %v46
    %v63 = vsel %vm55, %v23, %v47
    %v64 = vsel %vm56, %v24, %v48
    %v65 = vsel %vm57, %v25, %v49
    %v66 = vsel %vm58, %v26, %v50
    %v67 = vsel %vm59, %v27, %v51
    %v68 = vsel %vm60, %v28, %v52
    %69 = vst [vmem:[#allocation5] sm:$0xff] %v61
    %70 = vst [vmem:[#allocation5 + $0x8] sm:$0xff] %v62
    %71 = vst [vmem:[#allocation5 + $0x10] sm:$0xff] %v63
    %72 = vst [vmem:[#allocation5 + $0x18] sm:$0xff] %v64
    %73 = vst [vmem:[#allocation5 + $0x20] sm:$0xff] %v65
    %74 = vst [vmem:[#allocation5 + $0x28] sm:$0xff] %v66
    %75 = vst [vmem:[#allocation5 + $0x30] sm:$0xff] %v67
    %76 = vst [vmem:[#allocation5 + $0x38] sm:$0xff] %v68
    // Predicated region
    $region10: #{tpu_custom_call.1} parent=1 // pred_check
      _
    $region11: #{tpu_custom_call.1} parent=1 // pred_check_branch
      %78 = sbr.rel (0) target = $region13
    $region12: #{tpu_custom_call.1} parent=1 // pred_region
      %s80 = ssub.s32 1024, 1024
      %81 = vsyncadd [#allocation4], %s80
      %s83 = sshll.u32 [#allocation5], 4
      %s84 = int_to_ptr.vmem [resolvable:$true] %s83
      %86 = dma.vmem_to_hbm [thread:$0]  %s84, 1024, %s1, [#allocation4]
    $region13: #{tpu_custom_call.1} parent=1 // pred_fallthru
      _
    // Predicated region
    $region14: #{tpu_custom_call.1} parent=1 // pred_check
      _
    $region15: #{tpu_custom_call.1} parent=1 // pred_check_branch
      %88 = sbr.rel (0) target = $region17
    $region16: #{tpu_custom_call.1} parent=1 // pred_region
      %89 = dma.done [#allocation4], 1024
    $region17: #{tpu_custom_call.1} parent=1 // pred_fallthru
      _
    %90 = vsyncpa [#allocation3], 1
    %91 = vsyncpa [#allocation4], 1

</llo_original>
